<compile_context>
chip_gen: v7x
topology: tpu7x:2x2x1
jax: 0.10.0
libtpu: 0.0.40
codegen_flags: <defaults>
</compile_context>

<pallas_src>
import functools

import jax
import jax.numpy as jnp
from jax import lax
from jax.experimental import pallas as pl
from jax.experimental.pallas import tpu as pltpu

# contract last dim of lhs with last dim of rhs:  (M, K) x (N, K) -> (M, N)
_LAST_LAST = (((1,), (1,)), ((), ()))


def _innergw_cost_kernel(x_ref, y_ref, x12_ref, y12_ref, o_ref,
                         t_sc, s2_sc, s3_sc, *, n_mc, nj):
    """Grid = (B tiles [parallel], 2*nj reduction steps [arbitrary]).

    Reduction axis j:
      j in [0, nj)     -> (x1, y1) tile:  t  += kx1_j @ y1_j ; term2 += sum(kx1_j^2)
      j in [nj, 2*nj)  -> (x2, y2) tile:  m_j = t @ y2_j.T   ; term3 += sum(m_j * kx2_j)
    """
    j = pl.program_id(1)

    # ---- per-B-tile init (start of the reduction) ---------------------------
    @pl.when(j == 0)
    def _init():
        t_sc[...] = jnp.zeros_like(t_sc)
        s2_sc[...] = jnp.zeros_like(s2_sc)
        s3_sc[...] = jnp.zeros_like(s3_sc)

    x = x_ref[...]                                        # (tB, d)   native dtype
    xb = x12_ref[...]                                     # (tn, d)   x1_j or x2_j
    yb = y12_ref[...].astype(jnp.float32)                 # (tn, dp)  y1_j or y2_j

    # kx = x @ xb.T  -> (tB, tn), f32 accumulation on the MXU, no transpose.
    kx = lax.dot_general(x, xb, _LAST_LAST,
                         preferred_element_type=jnp.float32)

    @pl.when(j < nj)
    def _phase0():
        # t += kx1_j @ y1_j         (tB, dp)
        t_sc[...] += jnp.dot(kx, yb, preferred_element_type=jnp.float32)
        # term2 partial: sum over this tile's columns (padded cols are zero)
        s2_sc[...] += jnp.sum(kx * kx, axis=-1, keepdims=True)

    @pl.when(j >= nj)
    def _phase1():
        # m_j = (kx1 @ y1) @ y2_j.T  -> (tB, tn)   (reassociated term3)
        m = lax.dot_general(t_sc[...], yb, _LAST_LAST,
                            preferred_element_type=jnp.float32)
        s3_sc[...] += jnp.sum(m * kx, axis=-1, keepdims=True)

    # ---- finalize ------------------------------------------------------------
    @pl.when(j == 2 * nj - 1)
    def _finalize():
        yv = y_ref[...].astype(jnp.float32)
        k_y_y = jnp.sum(yv * yv, axis=-1, keepdims=True)           # (tB, 1)
        cost = (k_y_y
                - 2.0 * s2_sc[...] * (1.0 / float(n_mc))
                + s3_sc[...] * (1.0 / float(n_mc * n_mc)))
        o_ref[...] = cost.astype(o_ref.dtype)


def _round_up(v, m):
    return m * ((v + m - 1) // m)


def _pad_rows(a, target_rows):
    r = a.shape[0]
    if r == target_rows:
        return a
    return jnp.pad(a, ((0, target_rows - r), (0, 0)))


def innergw_cost(x, y, x1, x2, y1, y2, n_mc, *, tile_b=128, tile_n=256):
    """Pallas call wrapper; returns cost of shape (B,) in float32."""
    B, d = x.shape
    dp = y.shape[1]
    n = x1.shape[0]

    # Shrink tiles for small problems; only multiples of 8 (sublane) are needed
    # since all block last-dims use the full feature extents.
    # On v7x, pick tile_b so b_pad/tile_b >= 2 if you want both TensorCores busy.
    tile_b = min(tile_b, _round_up(B, 8))
    tile_n = min(tile_n, _round_up(n, 8))

    b_pad = _round_up(B, tile_b)
    n_pad = _round_up(n, tile_n)

    # Zero-padding: zero rows contribute exactly 0 to every sum, so normalizing
    # by the ORIGINAL n_mc keeps the math identical.
    x_p, y_p = _pad_rows(x, b_pad), _pad_rows(y, b_pad)
    # Stack MC sample sets row-wise: rows [0, n_pad) = (x1, y1),
    # rows [n_pad, 2*n_pad) = (x2, y2).  One streamed input pair, two phases.
    x12 = jnp.concatenate([_pad_rows(x1, n_pad), _pad_rows(x2, n_pad)], axis=0)
    y12 = jnp.concatenate([_pad_rows(y1, n_pad), _pad_rows(y2, n_pad)], axis=0)

    nj = n_pad // tile_n
    grid = (b_pad // tile_b, 2 * nj)
    kernel = functools.partial(_innergw_cost_kernel, n_mc=n_mc, nj=nj)

    # VMEM: O(tile) working set (double-buffered inputs + f32 scratches).
    # Cap well below v7x's 64 MiB per-TensorCore VMEM.
    in_itemsize = jnp.dtype(x.dtype).itemsize
    est = (2 * in_itemsize * (tile_b * (d + dp) + tile_n * (d + dp))   # dbl-buffered inputs
           + 4 * (tile_b * dp + 2 * tile_b)                            # f32 scratches
           + 4 * 2 * tile_b)                                           # output dbl-buffer
    vmem_limit = int(min(48 * 2**20, max(16 * 2**20, 4 * est)))

    out = pl.pallas_call(
        kernel,
        out_shape=jax.ShapeDtypeStruct((b_pad, 1), jnp.float32),
        grid_spec=pltpu.PrefetchScalarGridSpec(
            num_scalar_prefetch=0,
            grid=grid,
            in_specs=[
                pl.BlockSpec((tile_b, d), lambda i, j: (i, 0)),    # x   (per B-tile)
                pl.BlockSpec((tile_b, dp), lambda i, j: (i, 0)),   # y   (per B-tile)
                pl.BlockSpec((tile_n, d), lambda i, j: (j, 0)),    # x1|x2 streamed tile
                pl.BlockSpec((tile_n, dp), lambda i, j: (j, 0)),   # y1|y2 streamed tile
            ],
            out_specs=pl.BlockSpec((tile_b, 1), lambda i, j: (i, 0)),
            scratch_shapes=[
                pltpu.VMEM((tile_b, dp), jnp.float32),  # t = kx1 @ y1
                pltpu.VMEM((tile_b, 1), jnp.float32),   # term2 accumulator
                pltpu.VMEM((tile_b, 1), jnp.float32),   # term3 accumulator
            ],
        ),
        compiler_params=pltpu.CompilerParams(
            dimension_semantics=("parallel", "arbitrary"),
            vmem_limit_bytes=vmem_limit,
        ),
    )(x_p, y_p, x12, y12)
    return out[:B, 0]


# ------------------------- plain-JAX glue (module setup) -------------------------
# TODO(synk): `source` (a torch Distribution) and `mover` (an arbitrary nn.Module)
# are external objects; here they are a standard normal and a deterministic linear
# map in plain JAX — only the cost hot path runs inside the Pallas kernel.

def make_mover_params(key, d_in, d_out):
    """Deterministic linear 'mover' y = x @ W + b."""
    w_key, _ = jax.random.split(key)
    w = jax.random.normal(w_key, (d_in, d_out), dtype=jnp.float32) / jnp.sqrt(d_in)
    b = jnp.zeros((d_out,), dtype=jnp.float32)
    return w, b


def mover_apply(params, x):
    w, b = params
    return x @ w + b


def source_sample(key, n, d):
    """source = standard normal of dimension d."""
    return jax.random.normal(key, (n, d), dtype=jnp.float32)


def innergw_forward(key, x, y, mover_params, n_mc):
    """Reproduces innerGW_kernel.forward(x, y)."""
    d = x.shape[-1]
    k1, k2 = jax.random.split(key)
    x1 = source_sample(k1, n_mc, d)
    y1 = mover_apply(mover_params, x1)
    x2 = source_sample(k2, n_mc, d)
    y2 = mover_apply(mover_params, x2)
    return innergw_cost(x, y, x1, x2, y1, y2, n_mc)


def _reference_cost(x, y, x1, x2, y1, y2, n_mc):
    """Pure-JAX reference (literal transcription of the PyTorch forward)."""
    k_y_y = jnp.sum(y * y, axis=-1)
    k_x_x1 = x @ x1.T
    k_y_y1 = x @ x1.T
    k_x2_x = x2 @ x.T
    k_y1_y2 = y1 @ y2.T
    term2 = jnp.mean(k_x_x1 * k_y_y1, axis=-1)
    term3 = jnp.einsum('bi,ij,jb->b', k_x_x1, k_y1_y2, k_x2_x) / float(n_mc ** 2)
    return k_y_y - 2.0 * term2 + term3


if __name__ == "__main__":
    B, d, dp = 8, 32, 32
    n_mc = 8  # n_samples_mc

    root = jax.random.PRNGKey(0)
    k_x, k_y, k_mover, k_mc = jax.random.split(root, 4)

    x = jax.random.normal(k_x, (B, d), dtype=jnp.float32)
    y = jax.random.normal(k_y, (B, dp), dtype=jnp.float32)
    mover_params = make_mover_params(k_mover, d, dp)

    # Run forward (Pallas kernel inside)
    cost = innergw_forward(k_mc, x, y, mover_params, n_mc)
    jax.block_until_ready(cost)

    # Verify against pure-JAX reference with the same MC samples
    k1, k2 = jax.random.split(k_mc)
    x1 = source_sample(k1, n_mc, d)
    y1 = mover_apply(mover_params, x1)
    x2 = source_sample(k2, n_mc, d)
    y2 = mover_apply(mover_params, x2)
    ref = _reference_cost(x, y, x1, x2, y1, y2, n_mc)

    assert cost.shape == (B,)
    # Reassociated term3 changes f32 summation order slightly -> modest tolerance.
    assert jnp.allclose(cost, ref, rtol=1e-3, atol=1e-3), (cost, ref)

    print("KERNEL_OK")
</pallas_src>

<mosaic_0001>
module attributes {stable_mosaic.version = 11 : i64} {
  func.func @_innergw_cost_kernel(%arg0: i32, %arg1: i32, %arg2: memref<8x32xf32, #tpu.memory_space<vmem>>, %arg3: memref<8x32xf32, #tpu.memory_space<vmem>>, %arg4: memref<8x32xf32, #tpu.memory_space<vmem>>, %arg5: memref<8x32xf32, #tpu.memory_space<vmem>>, %arg6: memref<8x1xf32, #tpu.memory_space<vmem>>, %arg7: memref<8x32xf32, #tpu.memory_space<vmem>>, %arg8: memref<8x1xf32, #tpu.memory_space<vmem>>, %arg9: memref<8x1xf32, #tpu.memory_space<vmem>>) attributes {dimension_semantics = [#tpu.dimension_semantics<parallel>, #tpu.dimension_semantics<arbitrary>], iteration_bounds = array<i64: 1, 2>, scalar_prefetch = 0 : i64, scratch_operands = 3 : i64, tpu.core_type = #tpu.core_type<tc>, window_params = [{transform_indices = @transform_0, window_bounds = array<i64: 8, 32>}, {transform_indices = @transform_1, window_bounds = array<i64: 8, 32>}, {transform_indices = @transform_2, window_bounds = array<i64: 8, 32>}, {transform_indices = @transform_3, window_bounds = array<i64: 8, 32>}, {transform_indices = @transform_4, window_bounds = array<i64: 8, 1>}]} {
    %c0_i32 = arith.constant 0 : i32
    %0 = arith.cmpi eq, %arg1, %c0_i32 : i32
    %1 = arith.extui %0 : i1 to i32
    %c0_i32_0 = arith.constant 0 : i32
    %2 = arith.cmpi ne, %1, %c0_i32_0 : i32
    scf.if %2 {
      %cst_11 = arith.constant 0.000000e+00 : f32
      %16 = vector.broadcast %cst_11 : f32 to vector<8x32xf32>
      %c0_12 = arith.constant 0 : index
      %c0_13 = arith.constant 0 : index
      %17 = vector.load %arg7[%c0_12, %c0_13] : memref<8x32xf32, #tpu.memory_space<vmem>>, vector<8x32xf32>
      tpu.vector_store %arg7[%c0_12, %c0_13], %16 {strides = array<i32>} : memref<8x32xf32, #tpu.memory_space<vmem>>, vector<8x32xf32>,
      %cst_14 = arith.constant 0.000000e+00 : f32
      %18 = vector.broadcast %cst_14 : f32 to vector<8x1xf32>
      %c0_15 = arith.constant 0 : index
      %c0_16 = arith.constant 0 : index
      %19 = vector.load %arg8[%c0_15, %c0_16] : memref<8x1xf32, #tpu.memory_space<vmem>>, vector<8x1xf32>
      tpu.vector_store %arg8[%c0_15, %c0_16], %18 {strides = array<i32>} : memref<8x1xf32, #tpu.memory_space<vmem>>, vector<8x1xf32>,
      %cst_17 = arith.constant 0.000000e+00 : f32
      %20 = vector.broadcast %cst_17 : f32 to vector<8x1xf32>
      %c0_18 = arith.constant 0 : index
      %c0_19 = arith.constant 0 : index
      %21 = vector.load %arg9[%c0_18, %c0_19] : memref<8x1xf32, #tpu.memory_space<vmem>>, vector<8x1xf32>
      tpu.vector_store %arg9[%c0_18, %c0_19], %20 {strides = array<i32>} : memref<8x1xf32, #tpu.memory_space<vmem>>, vector<8x1xf32>,
    } else {
    }
    %c0 = arith.constant 0 : index
    %c0_1 = arith.constant 0 : index
    %3 = vector.load %arg2[%c0, %c0_1] : memref<8x32xf32, #tpu.memory_space<vmem>>, vector<8x32xf32>
    %c0_2 = arith.constant 0 : index
    %c0_3 = arith.constant 0 : index
    %4 = vector.load %arg4[%c0_2, %c0_3] : memref<8x32xf32, #tpu.memory_space<vmem>>, vector<8x32xf32>
    %c0_4 = arith.constant 0 : index
    %c0_5 = arith.constant 0 : index
    %5 = vector.load %arg5[%c0_4, %c0_5] : memref<8x32xf32, #tpu.memory_space<vmem>>, vector<8x32xf32>
    %cst = arith.constant dense<0.000000e+00> : vector<8x8xf32>
    %6 = tpu.matmul %3, %4, %cst {dimension_numbers = #tpu.dot_dimension_numbers<[1], [1], [0], [0], [0, 0, 1, 0], [], []>} : vector<8x32xf32>, vector<8x32xf32>, vector<8x8xf32> -> vector<8x8xf32>
    %c1_i32 = arith.constant 1 : i32
    %7 = arith.cmpi slt, %arg1, %c1_i32 : i32
    %8 = arith.extui %7 : i1 to i32
    %c0_i32_6 = arith.constant 0 : i32
    %9 = arith.cmpi ne, %8, %c0_i32_6 : i32
    scf.if %9 {
      %c0_11 = arith.constant 0 : index
      %c0_12 = arith.constant 0 : index
      %16 = vector.load %arg7[%c0_11, %c0_12] : memref<8x32xf32, #tpu.memory_space<vmem>>, vector<8x32xf32>
      %cst_13 = arith.constant dense<0.000000e+00> : vector<8x32xf32>
      %17 = tpu.matmul %6, %5, %cst_13 {dimension_numbers = #tpu.dot_dimension_numbers<[1], [0], [0], [1], [0, 0, 1, 1], [], []>} : vector<8x8xf32>, vector<8x32xf32>, vector<8x32xf32> -> vector<8x32xf32>
      %18 = arith.addf %16, %17 : vector<8x32xf32>
      %c0_14 = arith.constant 0 : index
      %c0_15 = arith.constant 0 : index
      %19 = vector.load %arg7[%c0_14, %c0_15] : memref<8x32xf32, #tpu.memory_space<vmem>>, vector<8x32xf32>
      tpu.vector_store %arg7[%c0_14, %c0_15], %18 {strides = array<i32>} : memref<8x32xf32, #tpu.memory_space<vmem>>, vector<8x32xf32>,
      %c0_16 = arith.constant 0 : index
      %c0_17 = arith.constant 0 : index
      %20 = vector.load %arg8[%c0_16, %c0_17] : memref<8x1xf32, #tpu.memory_space<vmem>>, vector<8x1xf32>
      %21 = arith.mulf %6, %6 : vector<8x8xf32>
      %cst_18 = arith.constant dense<0.000000e+00> : vector<8xf32>
      %22 = vector.multi_reduction <add>, %21, %cst_18 [1] : vector<8x8xf32> to vector<8xf32>
      %23 = vector.shape_cast %22 : vector<8xf32> to vector<8x1xf32>
      %24 = arith.addf %20, %23 : vector<8x1xf32>
      %c0_19 = arith.constant 0 : index
      %c0_20 = arith.constant 0 : index
      %25 = vector.load %arg8[%c0_19, %c0_20] : memref<8x1xf32, #tpu.memory_space<vmem>>, vector<8x1xf32>
      tpu.vector_store %arg8[%c0_19, %c0_20], %24 {strides = array<i32>} : memref<8x1xf32, #tpu.memory_space<vmem>>, vector<8x1xf32>,
    } else {
    }
    %c1_i32_7 = arith.constant 1 : i32
    %10 = arith.cmpi sge, %arg1, %c1_i32_7 : i32
    %11 = arith.extui %10 : i1 to i32
    %c0_i32_8 = arith.constant 0 : i32
    %12 = arith.cmpi ne, %11, %c0_i32_8 : i32
    scf.if %12 {
      %c0_11 = arith.constant 0 : index
      %c0_12 = arith.constant 0 : index
      %16 = vector.load %arg7[%c0_11, %c0_12] : memref<8x32xf32, #tpu.memory_space<vmem>>, vector<8x32xf32>
      %cst_13 = arith.constant dense<0.000000e+00> : vector<8x8xf32>
      %17 = tpu.matmul %16, %5, %cst_13 {dimension_numbers = #tpu.dot_dimension_numbers<[1], [1], [0], [0], [0, 0, 1, 0], [], []>} : vector<8x32xf32>, vector<8x32xf32>, vector<8x8xf32> -> vector<8x8xf32>
      %c0_14 = arith.constant 0 : index
      %c0_15 = arith.constant 0 : index
      %18 = vector.load %arg9[%c0_14, %c0_15] : memref<8x1xf32, #tpu.memory_space<vmem>>, vector<8x1xf32>
      %19 = arith.mulf %17, %6 : vector<8x8xf32>
      %cst_16 = arith.constant dense<0.000000e+00> : vector<8xf32>
      %20 = vector.multi_reduction <add>, %19, %cst_16 [1] : vector<8x8xf32> to vector<8xf32>
      %21 = vector.shape_cast %20 : vector<8xf32> to vector<8x1xf32>
      %22 = arith.addf %18, %21 : vector<8x1xf32>
      %c0_17 = arith.constant 0 : index
      %c0_18 = arith.constant 0 : index
      %23 = vector.load %arg9[%c0_17, %c0_18] : memref<8x1xf32, #tpu.memory_space<vmem>>, vector<8x1xf32>
      tpu.vector_store %arg9[%c0_17, %c0_18], %22 {strides = array<i32>} : memref<8x1xf32, #tpu.memory_space<vmem>>, vector<8x1xf32>,
    } else {
    }
    %c1_i32_9 = arith.constant 1 : i32
    %13 = arith.cmpi eq, %arg1, %c1_i32_9 : i32
    %14 = arith.extui %13 : i1 to i32
    %c0_i32_10 = arith.constant 0 : i32
    %15 = arith.cmpi ne, %14, %c0_i32_10 : i32
    scf.if %15 {
      %c0_11 = arith.constant 0 : index
      %c0_12 = arith.constant 0 : index
      %16 = vector.load %arg3[%c0_11, %c0_12] : memref<8x32xf32, #tpu.memory_space<vmem>>, vector<8x32xf32>
      %17 = arith.mulf %16, %16 : vector<8x32xf32>
      %cst_13 = arith.constant dense<0.000000e+00> : vector<8xf32>
      %18 = vector.multi_reduction <add>, %17, %cst_13 [1] : vector<8x32xf32> to vector<8xf32>
      %19 = vector.shape_cast %18 : vector<8xf32> to vector<8x1xf32>
      %c0_14 = arith.constant 0 : index
      %c0_15 = arith.constant 0 : index
      %20 = vector.load %arg8[%c0_14, %c0_15] : memref<8x1xf32, #tpu.memory_space<vmem>>, vector<8x1xf32>
      %cst_16 = arith.constant 2.000000e+00 : f32
      %21 = vector.broadcast %cst_16 : f32 to vector<8x1xf32>
      %22 = arith.mulf %21, %20 : vector<8x1xf32>
      %cst_17 = arith.constant 1.250000e-01 : f32
      %23 = vector.broadcast %cst_17 : f32 to vector<8x1xf32>
      %24 = arith.mulf %22, %23 : vector<8x1xf32>
      %25 = arith.subf %19, %24 : vector<8x1xf32>
      %c0_18 = arith.constant 0 : index
      %c0_19 = arith.constant 0 : index
      %26 = vector.load %arg9[%c0_18, %c0_19] : memref<8x1xf32, #tpu.memory_space<vmem>>, vector<8x1xf32>
      %cst_20 = arith.constant 1.562500e-02 : f32
      %27 = vector.broadcast %cst_20 : f32 to vector<8x1xf32>
      %28 = arith.mulf %26, %27 : vector<8x1xf32>
      %29 = arith.addf %25, %28 : vector<8x1xf32>
      %c0_21 = arith.constant 0 : index
      %c0_22 = arith.constant 0 : index
      %30 = vector.load %arg6[%c0_21, %c0_22] : memref<8x1xf32, #tpu.memory_space<vmem>>, vector<8x1xf32>
      tpu.vector_store %arg6[%c0_21, %c0_22], %29 {strides = array<i32>} : memref<8x1xf32, #tpu.memory_space<vmem>>, vector<8x1xf32>,
    } else {
    }
    return
  }
  func.func @transform_0(%arg0: i32, %arg1: i32) -> (i32, i32) {
    %c0_i32 = arith.constant 0 : i32
    %c0_i32_0 = arith.constant 0 : i32
    return %arg0, %c0_i32 : i32, i32
  }
  func.func @transform_1(%arg0: i32, %arg1: i32) -> (i32, i32) {
    %c0_i32 = arith.constant 0 : i32
    %c0_i32_0 = arith.constant 0 : i32
    return %arg0, %c0_i32 : i32, i32
  }
  func.func @transform_2(%arg0: i32, %arg1: i32) -> (i32, i32) {
    %c0_i32 = arith.constant 0 : i32
    %c0_i32_0 = arith.constant 0 : i32
    return %arg1, %c0_i32 : i32, i32
  }
  func.func @transform_3(%arg0: i32, %arg1: i32) -> (i32, i32) {
    %c0_i32 = arith.constant 0 : i32
    %c0_i32_0 = arith.constant 0 : i32
    return %arg1, %c0_i32 : i32, i32
  }
  func.func @transform_4(%arg0: i32, %arg1: i32) -> (i32, i32) {
    %c0_i32 = arith.constant 0 : i32
    %c0_i32_0 = arith.constant 0 : i32
    return %arg0, %c0_i32 : i32, i32
  }
}

</mosaic_0001>

<llo_original>
// kernel: tpu_custom_call.1
$region0: #{tpu_custom_call.1}
  #allocation0 [shape = 'u32[]', space=smem, size = 0x4, offset = 0x4, fixed_abs, tag = 'smem constant byte address 0x4 - core index']
  #allocation1 [shape = 'u32[144,128]{1,0:T(1,128)}', space=vmem, size = 0x12000, scoped, tag = 'internal scratch']
  #allocation2 [shape = 'f32[8,32]{1,0:T(8,128)}', space=vmem, size = 0x1000, scoped, tag = 'scratch operand']
  #allocation3 [shape = 'f32[8,1]{1,0:T(8,128)}', space=vmem, size = 0x1000, scoped, tag = 'scratch operand']
  #allocation4 [shape = 'f32[8,1]{1,0:T(8,128)}', space=vmem, size = 0x1000, scoped, tag = 'scratch operand']
  %s0 = inlined_call_operand.hbm [shape: f32[8,32], index: 0, kind: input, shape index: {}]
  %s1 = inlined_call_operand.hbm [shape: f32[8,32], index: 1, kind: input, shape index: {}]
  %s2 = inlined_call_operand.hbm [shape: f32[16,32], index: 2, kind: input, shape index: {}]
  %s3 = inlined_call_operand.hbm [shape: f32[16,32], index: 3, kind: input, shape index: {}]
  %s4 = inlined_call_operand.vmem [shape: f32[8,1], index: 4, kind: output, shape index: {}]
  %s5 = sld [smem:[#allocation0]]
  $region81: #{tpu_custom_call.1} parent=0
    _
  %s7 = ssub.s32 1, %s5
  %s8 = scalar_select 0, %s7, %s5
  $region1: #{tpu_custom_call.1} parent=0
    #allocation5 [shape = 'u8[4096]{0}', space=vmem, size = 0x1000, scoped, tag = 'input window, operand 0, single buffered']
    #allocation6 [shape = 's32[2]{0}', space=sflag, size = 0x8, scoped, tag = 'scoped memory for tpu_custom_call.1']
    #allocation7 [shape = 'u8[4096]{0}', space=vmem, size = 0x1000, scoped, tag = 'input window, operand 1, single buffered']
    #allocation8 [shape = 's32[1]{0}', space=sflag, size = 0x4, scoped, tag = 'scoped memory for tpu_custom_call.1']
    #allocation9 [shape = 'u8[8192]{0}', space=vmem, size = 0x2000, scoped, tag = 'input window, operand 2']
    #allocation10 [shape = 'u8[8192]{0}', space=vmem, size = 0x2000, scoped, tag = 'input window, operand 3']
    %9 = vsyncpa [#allocation6], 0
    %10 = vsyncpa [#allocation8], 0
    loop: start=0, step=1, limit=4
    $region2: #{tpu_custom_call.1} parent=1 // loop_pre_header
      _
    $region3: #{tpu_custom_call.1} parent=1 // loop_header
      %s12 = sphi 0, %s16
      %p13 = scmp.ge.s32.totalorder %s12, 4
      %s19 = sphi 0, %s31
      %s20 = sphi 0, %s27
      %s21 = sphi 0, %s19
      %s22 = sphi 0, %s20
      %s23 = sphi 0, %s21
      %s24 = sphi 0, %s22
      %s34 = sphi 0, %s36
      %s37 = sphi 0, %s34
      %s38 = sphi 0, %s37
      %s54 = sphi 0, %s38
      %s60 = sphi 0, %s62
      %s63 = sphi 0, %s60
      %s64 = sphi 0, %s63
      %s80 = sphi 0, %s64
      %s86 = sphi 0, %s88
      %s89 = sphi 0, %s86
      %s90 = sphi 0, %s89
      %s106 = sphi 0, %s90
      %s112 = sphi 0, %s114
      %s115 = sphi 0, %s112
      %s116 = sphi 0, %s115
      %s132 = sphi 0, %s116
      %s138 = sphi 0, %s140
      %s141 = sphi 0, %s138
      %s142 = sphi 0, %s141
      %s158 = sphi 0, %s142
    $region4: #{tpu_custom_call.1} parent=1 // loop_header_branch
      %15 = sbr.rel (%p13) target = $region8
    $region5: #{tpu_custom_call.1} parent=1 // loop_body
      %s17 = ssub.s32 %s12, 1
      %s18 = ssub.s32 %s12, 2
      %s25 = sadd.s32 1, %s20
      %p26 = scmp.ge.s32.totalorder %s25, 2
      %s27 = scalar_select %p26, 0, %s25
      %s28 = sadd.s32 1, %s19
      %s29 = scalar_select %p26, %s28, %s19
      %p30 = scmp.ge.s32.totalorder %s29, 1
      %s31 = scalar_select %p30, 0, %s29
      %s32 = ssub.s32 %s19, %s31
      %p33 = scmp.eq.s32.totalorder %s32, 0
      %s35 = sadd.s32 %s34, 1
      %s36 = scalar_select %p33, %s34, %s35
      %p39 = pneg %p33
      %p40 = scmp.eq.s32.totalorder %s12, 1
      %p41 = por %p39, %p40
      %p42 = scmp.ne.s32.totalorder %s34, %s37
      %p43 = scmp.eq.s32.totalorder %s12, 0
      %p44 = por %p42, %p43
      %p45 = scmp.ne.s32.totalorder %s34, %s37
      %p46 = scmp.eq.s32.totalorder %s17, 1
      %p47 = por %p45, %p46
      %p48 = scmp.ne.s32.totalorder %s37, %s38
      %p49 = scmp.eq.s32.totalorder %s17, 0
      %p50 = por %p48, %p49
      %p51 = scmp.ne.s32.totalorder %s37, %s38
      %p52 = scmp.eq.s32.totalorder %s18, 1
      %p53 = por %p51, %p52
      %p55 = scmp.ne.s32.totalorder %s38, %s54
      %p56 = scmp.eq.s32.totalorder %s18, 0
      %p57 = por %p55, %p56
      %s58 = ssub.s32 %s19, %s31
      %p59 = scmp.eq.s32.totalorder %s58, 0
      %s61 = sadd.s32 %s60, 1
      %s62 = scalar_select %p59, %s60, %s61
      %p65 = pneg %p59
      %p66 = scmp.eq.s32.totalorder %s12, 1
      %p67 = por %p65, %p66
      %p68 = scmp.ne.s32.totalorder %s60, %s63
      %p69 = scmp.eq.s32.totalorder %s12, 0
      %p70 = por %p68, %p69
      %p71 = scmp.ne.s32.totalorder %s60, %s63
      %p72 = scmp.eq.s32.totalorder %s17, 1
      %p73 = por %p71, %p72
      %p74 = scmp.ne.s32.totalorder %s63, %s64
      %p75 = scmp.eq.s32.totalorder %s17, 0
      %p76 = por %p74, %p75
      %p77 = scmp.ne.s32.totalorder %s63, %s64
      %p78 = scmp.eq.s32.totalorder %s18, 1
      %p79 = por %p77, %p78
      %p81 = scmp.ne.s32.totalorder %s64, %s80
      %p82 = scmp.eq.s32.totalorder %s18, 0
      %p83 = por %p81, %p82
      %s84 = ssub.s32 %s20, %s27
      %p85 = scmp.eq.s32.totalorder %s84, 0
      %s87 = sadd.s32 %s86, 1
      %s88 = scalar_select %p85, %s86, %s87
      %p91 = pneg %p85
      %p92 = scmp.eq.s32.totalorder %s12, 1
      %p93 = por %p91, %p92
      %p94 = scmp.ne.s32.totalorder %s86, %s89
      %p95 = scmp.eq.s32.totalorder %s12, 0
      %p96 = por %p94, %p95
      %p97 = scmp.ne.s32.totalorder %s86, %s89
      %p98 = scmp.eq.s32.totalorder %s17, 1
      %p99 = por %p97, %p98
      %p100 = scmp.ne.s32.totalorder %s89, %s90
      %p101 = scmp.eq.s32.totalorder %s17, 0
      %p102 = por %p100, %p101
      %p103 = scmp.ne.s32.totalorder %s89, %s90
      %p104 = scmp.eq.s32.totalorder %s18, 1
      %p105 = por %p103, %p104
      %p107 = scmp.ne.s32.totalorder %s90, %s106
      %p108 = scmp.eq.s32.totalorder %s18, 0
      %p109 = por %p107, %p108
      %s110 = ssub.s32 %s20, %s27
      %p111 = scmp.eq.s32.totalorder %s110, 0
      %s113 = sadd.s32 %s112, 1
      %s114 = scalar_select %p111, %s112, %s113
      %p117 = pneg %p111
      %p118 = scmp.eq.s32.totalorder %s12, 1
      %p119 = por %p117, %p118
      %p120 = scmp.ne.s32.totalorder %s112, %s115
      %p121 = scmp.eq.s32.totalorder %s12, 0
      %p122 = por %p120, %p121
      %p123 = scmp.ne.s32.totalorder %s112, %s115
      %p124 = scmp.eq.s32.totalorder %s17, 1
      %p125 = por %p123, %p124
      %p126 = scmp.ne.s32.totalorder %s115, %s116
      %p127 = scmp.eq.s32.totalorder %s17, 0
      %p128 = por %p126, %p127
      %p129 = scmp.ne.s32.totalorder %s115, %s116
      %p130 = scmp.eq.s32.totalorder %s18, 1
      %p131 = por %p129, %p130
      %p133 = scmp.ne.s32.totalorder %s116, %s132
      %p134 = scmp.eq.s32.totalorder %s18, 0
      %p135 = por %p133, %p134
      %s136 = ssub.s32 %s19, %s31
      %p137 = scmp.eq.s32.totalorder %s136, 0
      %s139 = sadd.s32 %s138, 1
      %s140 = scalar_select %p137, %s138, %s139
      %p143 = pneg %p137
      %p144 = scmp.eq.s32.totalorder %s12, 1
      %p145 = por %p143, %p144
      %p146 = scmp.ne.s32.totalorder %s138, %s141
      %p147 = scmp.eq.s32.totalorder %s12, 0
      %p148 = por %p146, %p147
      %p149 = scmp.ne.s32.totalorder %s138, %s141
      %p150 = scmp.eq.s32.totalorder %s17, 1
      %p151 = por %p149, %p150
      %p152 = scmp.ne.s32.totalorder %s141, %s142
      %p153 = scmp.eq.s32.totalorder %s17, 0
      %p154 = por %p152, %p153
      %p155 = scmp.ne.s32.totalorder %s141, %s142
      %p156 = scmp.eq.s32.totalorder %s18, 1
      %p157 = por %p155, %p156
      %p159 = scmp.ne.s32.totalorder %s142, %s158
      %p160 = scmp.eq.s32.totalorder %s18, 0
      %p161 = por %p159, %p160
      %p162 = scmp.le.s32.totalorder 1, %s12
      %p163 = scmp.lt.s32.totalorder %s12, 3
      %p164 = pnand %p162, %p163
      %p165 = pneg %p164
      // Predicated region
      $region9: #{tpu_custom_call.1} parent=5 // pred_check
        _
      $region10: #{tpu_custom_call.1} parent=5 // pred_check_branch
        %167 = sbr.rel (%p164) target = $region12
      $region11: #{tpu_custom_call.1} parent=5 // pred_region
        %s168 = ssub.s32 %s12, 1
        // Predicated region
        $region13: #{tpu_custom_call.1} parent=11 // pred_check
          %p169 = pneg %p50
        $region14: #{tpu_custom_call.1} parent=11 // pred_check_branch
          %171 = sbr.rel (%p169) target = $region16
        $region15: #{tpu_custom_call.1} parent=11 // pred_region
          %s173 = ssub.s32 128, 128
          %174 = vsyncadd [#allocation6], %s173
          %s175 = smul.addr %s21, 128
          %s176 = scalar_lea.hbm %s0, %s175
          %s178 = sshll.u32 [#allocation5], 4
          %s179 = int_to_ptr.vmem [resolvable:$true] %s178
          %181 = dma.hbm_to_vmem [thread:$0]  %s176, 128, %s179, [#allocation6]
        $region16: #{tpu_custom_call.1} parent=11 // pred_fallthru
          _
        // Predicated region
        $region17: #{tpu_custom_call.1} parent=11 // pred_check
          %p182 = pneg %p76
        $region18: #{tpu_custom_call.1} parent=11 // pred_check_branch
          %184 = sbr.rel (%p182) target = $region20
        $region19: #{tpu_custom_call.1} parent=11 // pred_region
          %s186 = ssub.s32 128, 128
          %187 = vsyncadd [#allocation8], %s186
          %s188 = smul.addr %s21, 128
          %s189 = scalar_lea.hbm %s1, %s188
          %s191 = sshll.u32 [#allocation7], 4
          %s192 = int_to_ptr.vmem [resolvable:$true] %s191
          %194 = dma.hbm_to_vmem [thread:$0]  %s189, 128, %s192, [#allocation8]
        $region20: #{tpu_custom_call.1} parent=11 // pred_fallthru
          _
      $region12: #{tpu_custom_call.1} parent=5 // pred_fallthru
        _
      %p195 = scmp.lt.s32.totalorder %s12, 2
      // Predicated region
      $region21: #{tpu_custom_call.1} parent=5 // pred_check
        %p196 = pneg %p195
      $region22: #{tpu_custom_call.1} parent=5 // pred_check_branch
        %198 = sbr.rel (%p196) target = $region24
      $region23: #{tpu_custom_call.1} parent=5 // pred_region
        // Predicated region
        $region25: #{tpu_custom_call.1} parent=23 // pred_check
          %p199 = pneg %p96
        $region26: #{tpu_custom_call.1} parent=23 // pred_check_branch
          %201 = sbr.rel (%p199) target = $region28
        $region27: #{tpu_custom_call.1} parent=23 // pred_region
          %s202 = sand.u32 %s12, 1
          %s203 = scalar_lea.sflag [#allocation6], %s202
          %s204 = sand.u32 %s86, 1
          %s205 = smul.addr %s204, 8
          %s206 = scalar_lea.vmem [#allocation9], %s205
          %s208 = ssub.s32 128, 128
          %209 = vsyncadd %s203, %s208
          %s210 = smul.addr %s20, 128
          %s211 = scalar_lea.hbm %s2, %s210
          %s213 = sshll.u32 %s206, 4
          %s214 = int_to_ptr.vmem [resolvable:$true] %s213
          %216 = dma.hbm_to_vmem [thread:$0]  %s211, 128, %s214, %s203
        $region28: #{tpu_custom_call.1} parent=23 // pred_fallthru
          _
        // Predicated region
        $region29: #{tpu_custom_call.1} parent=23 // pred_check
          %p217 = pneg %p122
        $region30: #{tpu_custom_call.1} parent=23 // pred_check_branch
          %219 = sbr.rel (%p217) target = $region32
        $region31: #{tpu_custom_call.1} parent=23 // pred_region
          %s220 = sand.u32 %s12, 1
          %s221 = scalar_lea.sflag [#allocation6], %s220
          %s222 = sand.u32 %s112, 1
          %s223 = smul.addr %s222, 8
          %s224 = scalar_lea.vmem [#allocation10], %s223
          %s226 = ssub.s32 128, 128
          %227 = vsyncadd %s221, %s226
          %s228 = smul.addr %s20, 128
          %s229 = scalar_lea.hbm %s3, %s228
          %s231 = sshll.u32 %s224, 4
          %s232 = int_to_ptr.vmem [resolvable:$true] %s231
          %234 = dma.hbm_to_vmem [thread:$0]  %s229, 128, %s232, %s221
        $region32: #{tpu_custom_call.1} parent=23 // pred_fallthru
          _
      $region24: #{tpu_custom_call.1} parent=5 // pred_fallthru
        _
      %p235 = scmp.le.s32.totalorder 1, %s12
      %p236 = scmp.lt.s32.totalorder %s12, 3
      %p237 = pnand %p235, %p236
      %p238 = pneg %p237
      // Predicated region
      $region33: #{tpu_custom_call.1} parent=5 // pred_check
        _
      $region34: #{tpu_custom_call.1} parent=5 // pred_check_branch
        %240 = sbr.rel (%p237) target = $region36
      $region35: #{tpu_custom_call.1} parent=5 // pred_region
        %s241 = ssub.s32 %s12, 1
        // Predicated region
        $region37: #{tpu_custom_call.1} parent=35 // pred_check
          %p242 = pneg %p50
        $region38: #{tpu_custom_call.1} parent=35 // pred_check_branch
          %244 = sbr.rel (%p242) target = $region40
        $region39: #{tpu_custom_call.1} parent=35 // pred_region
          %245 = dma.done [#allocation6], 128
        $region40: #{tpu_custom_call.1} parent=35 // pred_fallthru
          _
        // Predicated region
        $region41: #{tpu_custom_call.1} parent=35 // pred_check
          %p246 = pneg %p76
        $region42: #{tpu_custom_call.1} parent=35 // pred_check_branch
          %248 = sbr.rel (%p246) target = $region44
        $region43: #{tpu_custom_call.1} parent=35 // pred_region
          %249 = dma.done [#allocation8], 128
        $region44: #{tpu_custom_call.1} parent=35 // pred_fallthru
          _
        %s250 = sand.u32 %s17, 1
        %s251 = scalar_lea.sflag [#allocation6], %s250
        %s252 = sand.u32 %s89, 1
        %s253 = smul.addr %s252, 8
        %s254 = scalar_lea.vmem [#allocation9], %s253
        // Predicated region
        $region45: #{tpu_custom_call.1} parent=35 // pred_check
          %p255 = pneg %p102
        $region46: #{tpu_custom_call.1} parent=35 // pred_check_branch
          %257 = sbr.rel (%p255) target = $region48
        $region47: #{tpu_custom_call.1} parent=35 // pred_region
          %258 = dma.done %s251, 128
        $region48: #{tpu_custom_call.1} parent=35 // pred_fallthru
          _
        %s259 = sand.u32 %s17, 1
        %s260 = scalar_lea.sflag [#allocation6], %s259
        %s261 = sand.u32 %s115, 1
        %s262 = smul.addr %s261, 8
        %s263 = scalar_lea.vmem [#allocation10], %s262
        // Predicated region
        $region49: #{tpu_custom_call.1} parent=35 // pred_check
          %p264 = pneg %p128
        $region50: #{tpu_custom_call.1} parent=35 // pred_check_branch
          %266 = sbr.rel (%p264) target = $region52
        $region51: #{tpu_custom_call.1} parent=35 // pred_region
          %267 = dma.done %s260, 128
        $region52: #{tpu_custom_call.1} parent=35 // pred_fallthru
          _
        %p268 = pneg %p50
        %p269 = pneg %p47
        %p270 = pneg %p76
        %p271 = pneg %p73
        %s272 = sand.u32 %s17, 1
        %s273 = scalar_lea.sflag [#allocation6], %s272
        %s274 = sand.u32 %s89, 1
        %s275 = smul.addr %s274, 8
        %s276 = scalar_lea.vmem [#allocation9], %s275
        %p277 = pneg %p102
        %p278 = pneg %p99
        %s279 = sand.u32 %s17, 1
        %s280 = scalar_lea.sflag [#allocation6], %s279
        %s281 = sand.u32 %s115, 1
        %s282 = smul.addr %s281, 8
        %s283 = scalar_lea.vmem [#allocation10], %s282
        %p284 = pneg %p128
        %p285 = pneg %p125
        %p286 = pneg %p154
        %p287 = pneg %p151
        %p288 = scmp.lt.s32.totalorder %s21, 0
        %s289 = scalar_select %p288, %s21, 0
        %s290 = smul.addr %s289, 8
        %s291 = scalar_lea.vmem %s4, %s290
        %p292 = scmp.lt.s32.totalorder %s21, 0
        %s293 = scalar_select %p292, %s21, 0
        %s294 = smul.addr %s293, 8
        %s295 = scalar_lea.vmem %s4, %s294
        %p296 = scmp.eq.s32.totalorder %s22, 0
        // Predicated region
        $region53: #{tpu_custom_call.1} parent=35 // pred_check
          %p297 = pneg %p296
        $region54: #{tpu_custom_call.1} parent=35 // pred_check_branch
          %299 = sbr.rel (%p297) target = $region56
        $region55: #{tpu_custom_call.1} parent=35 // pred_region
          %vm300 = vcmask 261120
          %301 = vst.msk [vmem:[#allocation2] sm:$0xff] %vm300, 0.0
          %vm302 = vcmask 7168
          %303 = vst.msk [vmem:[#allocation3] sm:$0xff] %vm302, 0.0
          %304 = vst.msk [vmem:[#allocation4] sm:$0xff] %vm302, 0.0
        $region56: #{tpu_custom_call.1} parent=35 // pred_fallthru
          _
        %v305 = vld [vmem:[#allocation5] sm:$0xff]
        %v306 = vld [vmem:[%s254] sm:$0xff]
        %v307 = vld [vmem:[%s263] sm:$0xff]
        %vm308 = vcmask 261120
        %v310 = vsel %vm308, %v305, 0
        %v313 = vsel %vm308, %v306, 0
        %315 = vmatprep.subr.mxu0 0.0
        %316 = vmatpush1.xpose.msra.mxu0 %v313
        %317 = vmatprep.subr.mxu0 0.0
        %318 = vmatpush1.xpose.msra.mxu0 0.0
        %319 = vmatprep.subr.mxu0 0.0
        %320 = vmatpush1.xpose.msra.mxu0 0.0
        %321 = vmatprep.subr.mxu0 0.0
        %322 = vmatpush1.xpose.msra.mxu0 0.0
        %323 = vmatprep.subr.mxu0 0.0
        %324 = vmatpush1.xpose.msra.mxu0 0.0
        %325 = vmatprep.subr.mxu0 0.0
        %326 = vmatpush1.xpose.msra.mxu0 0.0
        %327 = vmatprep.subr.mxu0 0.0
        %328 = vmatpush1.xpose.msra.mxu0 0.0
        %329 = vmatprep.subr.mxu0 0.0
        %330 = vmatpush1.xpose.msra.mxu0 0.0
        %331 = vmatprep.subr.mxu0 0.0
        %332 = vmatpush1.xpose.msra.mxu0 0.0
        %333 = vmatprep.subr.mxu0 0.0
        %334 = vmatpush1.xpose.msra.mxu0 0.0
        %335 = vmatprep.subr.mxu0 0.0
        %336 = vmatpush1.xpose.msra.mxu0 0.0
        %337 = vmatprep.subr.mxu0 0.0
        %338 = vmatpush1.xpose.msra.mxu0 0.0
        %339 = vmatprep.subr.mxu0 0.0
        %340 = vmatpush1.xpose.msra.mxu0 0.0
        %341 = vmatprep.subr.mxu0 0.0
        %342 = vmatpush1.xpose.msra.mxu0 0.0
        %343 = vmatprep.subr.mxu0 0.0
        %344 = vmatpush1.xpose.msra.mxu0 0.0
        %345 = vmatprep.subr.mxu0 0.0
        %346 = vmatpush1.xpose.msra.mxu0 0.0
        %347 = vmatprep.subr.mxu0 0.0
        %348 = vmatpush1.xpose.msra.mxu0 0.0
        %349 = vmatprep.subr.mxu0 0.0
        %350 = vmatpush1.xpose.msra.mxu0 0.0
        %351 = vmatprep.subr.mxu0 0.0
        %352 = vmatpush1.xpose.msra.mxu0 0.0
        %353 = vmatprep.subr.mxu0 0.0
        %354 = vmatpush1.xpose.msra.mxu0 0.0
        %355 = vmatprep.subr.mxu0 0.0
        %356 = vmatpush1.xpose.msra.mxu0 0.0
        %357 = vmatprep.subr.mxu0 0.0
        %358 = vmatpush1.xpose.msra.mxu0 0.0
        %359 = vmatprep.subr.mxu0 0.0
        %360 = vmatpush1.xpose.msra.mxu0 0.0
        %361 = vmatprep.subr.mxu0 0.0
        %362 = vmatpush1.xpose.msra.mxu0 0.0
        %363 = vmatprep.subr.mxu0 0.0
        %364 = vmatpush1.xpose.msra.mxu0 0.0
        %365 = vmatprep.subr.mxu0 0.0
        %366 = vmatpush1.xpose.msra.mxu0 0.0
        %367 = vmatprep.subr.mxu0 0.0
        %368 = vmatpush1.xpose.msra.mxu0 0.0
        %369 = vmatprep.subr.mxu0 0.0
        %370 = vmatpush1.xpose.msra.mxu0 0.0
        %371 = vmatprep.subr.mxu0 0.0
        %372 = vmatpush1.xpose.msra.mxu0 0.0
        %373 = vmatprep.subr.mxu0 0.0
        %374 = vmatpush1.xpose.msra.mxu0 0.0
        %375 = vmatprep.subr.mxu0 0.0
        %376 = vmatpush1.xpose.msra.mxu0 0.0
        %377 = vmatprep.subr.mxu0 0.0
        %378 = vmatpush1.xpose.msra.mxu0 0.0
        %379 = vmatprep.mubr.f32.mxu0 0.0
        %380 = vmatmul.mubr.f32.gmra.mrb[0].mxu0 %v310
        %v381 = vpop.f32.mrb[0].mxu0
        %v382 = vadd.f32 0.0, %v381
        %v383 = vpop.f32.mrb[0].mxu0
        %384 = vdwg.mxu0
        %p385 = scmp.lt.s32.totalorder %s22, 1
        // Predicated region
        $region57: #{tpu_custom_call.1} parent=35 // pred_check
          %p386 = pneg %p385
        $region58: #{tpu_custom_call.1} parent=35 // pred_check_branch
          %388 = sbr.rel (%p386) target = $region60
        $region59: #{tpu_custom_call.1} parent=35 // pred_region
          %v389 = vld [vmem:[#allocation2] sm:$0xff]
          %vm390 = vcmask 64512
          %v392 = vsel %vm390, %v382, 0
          %394 = vmatprep.subr.mxu0 0.0
          %395 = vmatpush1.msra.mxu0 %v307
          %396 = vmatprep.subr.mxu0 0.0
          %397 = vmatpush1.msra.mxu0 0.0
          %398 = vmatprep.subr.mxu0 0.0
          %399 = vmatpush1.msra.mxu0 0.0
          %400 = vmatprep.subr.mxu0 0.0
          %401 = vmatpush1.msra.mxu0 0.0
          %402 = vmatprep.subr.mxu0 0.0
          %403 = vmatpush1.msra.mxu0 0.0
          %404 = vmatprep.subr.mxu0 0.0
          %405 = vmatpush1.msra.mxu0 0.0
          %406 = vmatprep.subr.mxu0 0.0
          %407 = vmatpush1.msra.mxu0 0.0
          %408 = vmatprep.subr.mxu0 0.0
          %409 = vmatpush1.msra.mxu0 0.0
          %410 = vmatprep.subr.mxu0 0.0
          %411 = vmatpush1.msra.mxu0 0.0
          %412 = vmatprep.subr.mxu0 0.0
          %413 = vmatpush1.msra.mxu0 0.0
          %414 = vmatprep.subr.mxu0 0.0
          %415 = vmatpush1.msra.mxu0 0.0
          %416 = vmatprep.subr.mxu0 0.0
          %417 = vmatpush1.msra.mxu0 0.0
          %418 = vmatprep.subr.mxu0 0.0
          %419 = vmatpush1.msra.mxu0 0.0
          %420 = vmatprep.subr.mxu0 0.0
          %421 = vmatpush1.msra.mxu0 0.0
          %422 = vmatprep.subr.mxu0 0.0
          %423 = vmatpush1.msra.mxu0 0.0
          %424 = vmatprep.subr.mxu0 0.0
          %425 = vmatpush1.msra.mxu0 0.0
          %426 = vmatprep.subr.mxu0 0.0
          %427 = vmatpush1.msra.mxu0 0.0
          %428 = vmatprep.subr.mxu0 0.0
          %429 = vmatpush1.msra.mxu0 0.0
          %430 = vmatprep.subr.mxu0 0.0
          %431 = vmatpush1.msra.mxu0 0.0
          %432 = vmatprep.subr.mxu0 0.0
          %433 = vmatpush1.msra.mxu0 0.0
          %434 = vmatprep.subr.mxu0 0.0
          %435 = vmatpush1.msra.mxu0 0.0
          %436 = vmatprep.subr.mxu0 0.0
          %437 = vmatpush1.msra.mxu0 0.0
          %438 = vmatprep.subr.mxu0 0.0
          %439 = vmatpush1.msra.mxu0 0.0
          %440 = vmatprep.subr.mxu0 0.0
          %441 = vmatpush1.msra.mxu0 0.0
          %442 = vmatprep.subr.mxu0 0.0
          %443 = vmatpush1.msra.mxu0 0.0
          %444 = vmatprep.subr.mxu0 0.0
          %445 = vmatpush1.msra.mxu0 0.0
          %446 = vmatprep.subr.mxu0 0.0
          %447 = vmatpush1.msra.mxu0 0.0
          %448 = vmatprep.subr.mxu0 0.0
          %449 = vmatpush1.msra.mxu0 0.0
          %450 = vmatprep.subr.mxu0 0.0
          %451 = vmatpush1.msra.mxu0 0.0
          %452 = vmatprep.subr.mxu0 0.0
          %453 = vmatpush1.msra.mxu0 0.0
          %454 = vmatprep.subr.mxu0 0.0
          %455 = vmatpush1.msra.mxu0 0.0
          %456 = vmatprep.subr.mxu0 0.0
          %457 = vmatpush1.msra.mxu0 0.0
          %458 = vmatprep.mubr.f32.mxu0 0.0
          %459 = vmatmul.mubr.f32.gmra.mrb[0].mxu0 %v392
          %v460 = vpop.f32.mrb[0].mxu0
          %v461 = vadd.f32 0.0, %v460
          %v462 = vpop.f32.mrb[0].mxu0
          %463 = vdwg.mxu0
          %v464 = vadd.f32 %v389, %v461
          %465 = vst.msk [vmem:[#allocation2] sm:$0xff] %vm308, %v464
          %v466 = vld [vmem:[#allocation3] sm:$0xff]
          %v467 = vmul.f32 %v382, %v382
          %v468 = vsel %vm390, %v467, 0.0
          %469 = vadd.xlane.f32.xlu0 %v468
          %v470 = vpop.xlane.xlu0 %469
          %v471 = vadd.f32 %v466, %v470
          %vm472 = vcmask 7168
          %473 = vst.msk [vmem:[#allocation3] sm:$0xff] %vm472, %v471
        $region60: #{tpu_custom_call.1} parent=35 // pred_fallthru
          _
        %p474 = scmp.ge.s32.totalorder %s22, 1
        // Predicated region
        $region61: #{tpu_custom_call.1} parent=35 // pred_check
          %p475 = pneg %p474
        $region62: #{tpu_custom_call.1} parent=35 // pred_check_branch
          %477 = sbr.rel (%p475) target = $region64
        $region63: #{tpu_custom_call.1} parent=35 // pred_region
          %v478 = vld [vmem:[#allocation2] sm:$0xff]
          %v480 = vsel %vm308, %v478, 0
          %v483 = vsel %vm308, %v307, 0
          %485 = vmatprep.subr.mxu0 0.0
          %486 = vmatpush1.xpose.msra.mxu0 %v483
          %487 = vmatprep.subr.mxu0 0.0
          %488 = vmatpush1.xpose.msra.mxu0 0.0
          %489 = vmatprep.subr.mxu0 0.0
          %490 = vmatpush1.xpose.msra.mxu0 0.0
          %491 = vmatprep.subr.mxu0 0.0
          %492 = vmatpush1.xpose.msra.mxu0 0.0
          %493 = vmatprep.subr.mxu0 0.0
          %494 = vmatpush1.xpose.msra.mxu0 0.0
          %495 = vmatprep.subr.mxu0 0.0
          %496 = vmatpush1.xpose.msra.mxu0 0.0
          %497 = vmatprep.subr.mxu0 0.0
          %498 = vmatpush1.xpose.msra.mxu0 0.0
          %499 = vmatprep.subr.mxu0 0.0
          %500 = vmatpush1.xpose.msra.mxu0 0.0
          %501 = vmatprep.subr.mxu0 0.0
          %502 = vmatpush1.xpose.msra.mxu0 0.0
          %503 = vmatprep.subr.mxu0 0.0
          %504 = vmatpush1.xpose.msra.mxu0 0.0
          %505 = vmatprep.subr.mxu0 0.0
          %506 = vmatpush1.xpose.msra.mxu0 0.0
          %507 = vmatprep.subr.mxu0 0.0
          %508 = vmatpush1.xpose.msra.mxu0 0.0
          %509 = vmatprep.subr.mxu0 0.0
          %510 = vmatpush1.xpose.msra.mxu0 0.0
          %511 = vmatprep.subr.mxu0 0.0
          %512 = vmatpush1.xpose.msra.mxu0 0.0
          %513 = vmatprep.subr.mxu0 0.0
          %514 = vmatpush1.xpose.msra.mxu0 0.0
          %515 = vmatprep.subr.mxu0 0.0
          %516 = vmatpush1.xpose.msra.mxu0 0.0
          %517 = vmatprep.subr.mxu0 0.0
          %518 = vmatpush1.xpose.msra.mxu0 0.0
          %519 = vmatprep.subr.mxu0 0.0
          %520 = vmatpush1.xpose.msra.mxu0 0.0
          %521 = vmatprep.subr.mxu0 0.0
          %522 = vmatpush1.xpose.msra.mxu0 0.0
          %523 = vmatprep.subr.mxu0 0.0
          %524 = vmatpush1.xpose.msra.mxu0 0.0
          %525 = vmatprep.subr.mxu0 0.0
          %526 = vmatpush1.xpose.msra.mxu0 0.0
          %527 = vmatprep.subr.mxu0 0.0
          %528 = vmatpush1.xpose.msra.mxu0 0.0
          %529 = vmatprep.subr.mxu0 0.0
          %530 = vmatpush1.xpose.msra.mxu0 0.0
          %531 = vmatprep.subr.mxu0 0.0
          %532 = vmatpush1.xpose.msra.mxu0 0.0
          %533 = vmatprep.subr.mxu0 0.0
          %534 = vmatpush1.xpose.msra.mxu0 0.0
          %535 = vmatprep.subr.mxu0 0.0
          %536 = vmatpush1.xpose.msra.mxu0 0.0
          %537 = vmatprep.subr.mxu0 0.0
          %538 = vmatpush1.xpose.msra.mxu0 0.0
          %539 = vmatprep.subr.mxu0 0.0
          %540 = vmatpush1.xpose.msra.mxu0 0.0
          %541 = vmatprep.subr.mxu0 0.0
          %542 = vmatpush1.xpose.msra.mxu0 0.0
          %543 = vmatprep.subr.mxu0 0.0
          %544 = vmatpush1.xpose.msra.mxu0 0.0
          %545 = vmatprep.subr.mxu0 0.0
          %546 = vmatpush1.xpose.msra.mxu0 0.0
          %547 = vmatprep.subr.mxu0 0.0
          %548 = vmatpush1.xpose.msra.mxu0 0.0
          %549 = vmatprep.mubr.f32.mxu0 0.0
          %550 = vmatmul.mubr.f32.gmra.mrb[0].mxu0 %v480
          %v551 = vpop.f32.mrb[0].mxu0
          %v552 = vadd.f32 0.0, %v551
          %v553 = vpop.f32.mrb[0].mxu0
          %554 = vdwg.mxu0
          %v555 = vld [vmem:[#allocation4] sm:$0xff]
          %v556 = vmul.f32 %v552, %v382
          %vm557 = vcmask 64512
          %v558 = vsel %vm557, %v556, 0.0
          %559 = vadd.xlane.f32.xlu0 %v558
          %v560 = vpop.xlane.xlu0 %559
          %v561 = vadd.f32 %v555, %v560
          %vm562 = vcmask 7168
          %563 = vst.msk [vmem:[#allocation4] sm:$0xff] %vm562, %v561
        $region64: #{tpu_custom_call.1} parent=35 // pred_fallthru
          _
        %p564 = scmp.eq.s32.totalorder %s22, 1
        // Predicated region
        $region65: #{tpu_custom_call.1} parent=35 // pred_check
          %p565 = pneg %p564
        $region66: #{tpu_custom_call.1} parent=35 // pred_check_branch
          %567 = sbr.rel (%p565) target = $region68
        $region67: #{tpu_custom_call.1} parent=35 // pred_region
          %v568 = vld [vmem:[#allocation7] sm:$0xff]
          %v569 = vmul.f32 %v568, %v568
          %v570 = vsel %vm308, %v569, 0.0
          %571 = vadd.xlane.f32.xlu0 %v570
          %v572 = vpop.xlane.xlu0 %571
          %v573 = vld [vmem:[#allocation3] sm:$0xff]
          %v574 = vmul.f32 %v573, 2.0
          %v575 = vmul.f32 %v574, 0.125
          %v576 = vsub.f32 %v572, %v575
          %v577 = vld [vmem:[#allocation4] sm:$0xff]
          %v578 = vmul.f32 %v577, 0.015625
          %v579 = vadd.f32 %v576, %v578
          %vm580 = vcmask 7168
          %581 = vst.msk [vmem:[%s295] sm:$0xff] %vm580, %v579
        $region68: #{tpu_custom_call.1} parent=35 // pred_fallthru
          _
        %p582 = scmp.lt.s32.totalorder %s21, 0
        %s583 = scalar_select %p582, %s21, 0
        %s584 = smul.addr %s583, 8
        %s585 = scalar_lea.vmem %s4, %s584
        // Predicated region
        $region69: #{tpu_custom_call.1} parent=35 // pred_check
          %p586 = pneg %p151
        $region70: #{tpu_custom_call.1} parent=35 // pred_check_branch
          %588 = sbr.rel (%p586) target = $region72
        $region71: #{tpu_custom_call.1} parent=35 // pred_region
          _
        $region72: #{tpu_custom_call.1} parent=35 // pred_fallthru
          _
        // Predicated region
        $region73: #{tpu_custom_call.1} parent=35 // pred_check
          %p589 = pneg %p151
        $region74: #{tpu_custom_call.1} parent=35 // pred_check_branch
          %591 = sbr.rel (%p589) target = $region76
        $region75: #{tpu_custom_call.1} parent=35 // pred_region
          %p592 = scmp.lt.s32.totalorder %s21, 0
          %s593 = scalar_select %p592, %s21, 0
          %s594 = smul.addr %s593, 8
          %s595 = scalar_lea.vmem %s4, %s594
        $region76: #{tpu_custom_call.1} parent=35 // pred_fallthru
          _
      $region36: #{tpu_custom_call.1} parent=5 // pred_fallthru
        _
      %p596 = scmp.le.s32.totalorder 2, %s12
      // Predicated region
      $region77: #{tpu_custom_call.1} parent=5 // pred_check
        %p597 = pneg %p596
      $region78: #{tpu_custom_call.1} parent=5 // pred_check_branch
        %599 = sbr.rel (%p597) target = $region80
      $region79: #{tpu_custom_call.1} parent=5 // pred_region
        %s600 = ssub.s32 %s12, 2
      $region80: #{tpu_custom_call.1} parent=5 // pred_fallthru
        _
    $region6: #{tpu_custom_call.1} parent=1 // loop_footer
      %s16 = sadd.s32 1, %s12
    $region7: #{tpu_custom_call.1} parent=1 // loop_footer_branch
      %11 = sbr.rel target = $region3
    $region8: #{tpu_custom_call.1} parent=1 // loop_exit
      _
    %601 = vsyncpa [#allocation6], 1
    %s602 = scalar_lea.sflag [#allocation6], 1
    %603 = vsyncpa %s602, 1
    %604 = vsyncpa [#allocation8], 1

</llo_original>
